<compile_context>
chip_gen: v7x
topology: tpu7x:2x2x1
jax: 0.10.0
libtpu: 0.0.40
codegen_flags: <defaults>
</compile_context>

<pallas_src>
import functools

import jax
import jax.numpy as jnp
from jax.experimental import pallas as pl
from jax.experimental.pallas import tpu as pltpu

NEG_SLOPE = 0.01          # LeakyReLU negative_slope
IN_EPS = 1e-5             # InstanceNorm3d eps


def _round_up(x, m):
    return (x + m - 1) // m * m


def _cdiv(a, b):
    return (a + b - 1) // b


def _vmem_budget():
    """Generation-aware scoped-VMEM limit (v5e/v6e: 128 MiB, v7x: 64 MiB per core)."""
    cap = 64 * 1024 * 1024          # conservative default if the query fails
    try:
        info = pltpu.get_tpu_info()
        cap = int(getattr(info, "vmem_capacity_bytes", cap))
    except Exception:
        pass
    return int(min(0.6 * cap, 100 * 1024 * 1024))


_VMEM_LIMIT = _vmem_budget()


def _split_dim(size, align, cap):
    """Tile <= cap (multiple of `align`) covering `size`; returns (tile, padded_size)."""
    padded = _round_up(size, align)
    if padded <= cap:
        return padded, padded
    n = _cdiv(padded, cap)
    tile = _round_up(_cdiv(padded, n), align)
    return tile, tile * n


# ---------------------------------------------------------------------------
# Kernel 1: tiled bf16 matmul (f32 accumulation), optional fused column stats
# ---------------------------------------------------------------------------
def _mm_stats_kernel(a_ref, b_ref, o_ref, st_ref, acc_ref):
    @pl.when(pl.program_id(2) == 0)
    def _():
        acc_ref[...] = jnp.zeros_like(acc_ref)

    acc_ref[...] += jnp.dot(a_ref[...], b_ref[...],
                            preferred_element_type=jnp.float32)

    @pl.when(pl.program_id(2) == pl.num_programs(2) - 1)
    def _():
        acc = acc_ref[...]
        o_ref[...] = acc.astype(o_ref.dtype)
        st_ref[...] = jnp.zeros_like(st_ref)            # deterministic pad rows
        st_ref[0:1, :] = jnp.sum(acc, axis=0, keepdims=True)
        st_ref[1:2, :] = jnp.sum(acc * acc, axis=0, keepdims=True)


def _mm_kernel(a_ref, b_ref, o_ref, acc_ref):
    @pl.when(pl.program_id(2) == 0)
    def _():
        acc_ref[...] = jnp.zeros_like(acc_ref)

    acc_ref[...] += jnp.dot(a_ref[...], b_ref[...],
                            preferred_element_type=jnp.float32)

    @pl.when(pl.program_id(2) == pl.num_programs(2) - 1)
    def _():
        o_ref[...] = acc_ref[...].astype(o_ref.dtype)


def matmul_pallas(a, b, *, with_stats, out_dtype=jnp.bfloat16):
    """a: [M, K], b: [K, N]; bf16 MXU operands, f32 accumulation.
    Returns padded [Mp, Np] (+ colsum/colsumsq over rows when with_stats)."""
    M, K = a.shape
    K2, N = b.shape
    assert K == K2
    tm, Mp = _split_dim(M, 16, 1024)
    tk_cap = 4096 if tm <= 256 else 2048
    tk, Kp = _split_dim(K, 128, tk_cap)
    tn_cap = 512 if Kp > 1024 else 2048
    tn, Np = _split_dim(N, 128, tn_cap)
    mt, nt, kt = Mp // tm, Np // tn, Kp // tk

    a_p = jnp.pad(a.astype(jnp.bfloat16), ((0, Mp - M), (0, Kp - K)))
    b_p = jnp.pad(b.astype(jnp.bfloat16), ((0, Kp - K), (0, Np - N)))

    in_specs = [pl.BlockSpec((tm, tk), lambda i, j, k: (i, k)),
                pl.BlockSpec((tk, tn), lambda i, j, k: (k, j))]
    cparams = pltpu.CompilerParams(
        dimension_semantics=("parallel", "parallel", "arbitrary"),
        vmem_limit_bytes=_VMEM_LIMIT)

    if with_stats:
        out, stats = pl.pallas_call(
            _mm_stats_kernel,
            out_shape=(jax.ShapeDtypeStruct((Mp, Np), out_dtype),
                       jax.ShapeDtypeStruct((mt * 8, Np), jnp.float32)),
            grid_spec=pltpu.PrefetchScalarGridSpec(
                num_scalar_prefetch=0, grid=(mt, nt, kt),
                in_specs=in_specs,
                out_specs=(pl.BlockSpec((tm, tn), lambda i, j, k: (i, j)),
                           pl.BlockSpec((8, tn), lambda i, j, k: (i, j))),
                scratch_shapes=[pltpu.VMEM((tm, tn), jnp.float32)]),
            compiler_params=cparams,
        )(a_p, b_p)
        colsum = jnp.sum(stats[0::8, :], axis=0)
        colsq = jnp.sum(stats[1::8, :], axis=0)
        return out, colsum, colsq

    out = pl.pallas_call(
        _mm_kernel,
        out_shape=jax.ShapeDtypeStruct((Mp, Np), out_dtype),
        grid_spec=pltpu.PrefetchScalarGridSpec(
            num_scalar_prefetch=0, grid=(mt, nt, kt),
            in_specs=in_specs,
            out_specs=pl.BlockSpec((tm, tn), lambda i, j, k: (i, j)),
            scratch_shapes=[pltpu.VMEM((tm, tn), jnp.float32)]),
        compiler_params=cparams,
    )(a_p, b_p)
    return out


# ---------------------------------------------------------------------------
# Kernel 2: fused direct 3x3x3 stride-1 conv with in-kernel 27-tap reduction
#           and fused InstanceNorm column sum / sum-of-squares epilogue.
# Input is a spatially pre-padded, zero-bordered, channels-last bf16 volume.
# ---------------------------------------------------------------------------
def _conv3x3_kernel(Ho, Wo, x0_ref, x1_ref, x2_ref, w_ref, o_ref, st_ref, acc_ref):
    acc_ref[...] = jnp.zeros_like(acc_ref)
    M = Ho * Wo
    for kd, xr in enumerate((x0_ref, x1_ref, x2_ref)):
        for kh in range(3):
            for kw in range(3):
                a = xr[0, kh:kh + Ho, kw:kw + Wo, :]
                a = a.reshape(M, a.shape[-1])
                acc_ref[...] += jnp.dot(a, w_ref[kd * 9 + kh * 3 + kw],
                                        preferred_element_type=jnp.float32)
    acc = acc_ref[...]
    o_ref[...] = acc.astype(o_ref.dtype)
    st_ref[...] = jnp.zeros_like(st_ref)
    st_ref[0:1, :] = jnp.sum(acc, axis=0, keepdims=True)
    st_ref[1:2, :] = jnp.sum(acc * acc, axis=0, keepdims=True)


def conv3x3_direct(xpad, w27):
    """xpad: (D+2, H+2, W+2, Cp) bf16 zero-bordered volume; w27: (27, Cp, Coutp) bf16.
    Returns (raw2d (D*H*W, Coutp) bf16, colsum f32, colsumsq f32)."""
    Dp2, Hp2, Wp2, Cp = xpad.shape
    Do, Ho, Wo = Dp2 - 2, Hp2 - 2, Wp2 - 2
    Coutp = w27.shape[-1]
    M = Ho * Wo
    kern = functools.partial(_conv3x3_kernel, Ho, Wo)
    out, stats = pl.pallas_call(
        kern,
        out_shape=(jax.ShapeDtypeStruct((Do * M, Coutp), jnp.bfloat16),
                   jax.ShapeDtypeStruct((Do * 8, Coutp), jnp.float32)),
        grid_spec=pltpu.PrefetchScalarGridSpec(
            num_scalar_prefetch=0, grid=(Do,),
            in_specs=[
                pl.BlockSpec((1, Hp2, Wp2, Cp), lambda d: (d, 0, 0, 0)),
                pl.BlockSpec((1, Hp2, Wp2, Cp), lambda d: (d + 1, 0, 0, 0)),
                pl.BlockSpec((1, Hp2, Wp2, Cp), lambda d: (d + 2, 0, 0, 0)),
                pl.BlockSpec((27, Cp, Coutp), lambda d: (0, 0, 0)),
            ],
            out_specs=(pl.BlockSpec((M, Coutp), lambda d: (d, 0)),
                       pl.BlockSpec((8, Coutp), lambda d: (d, 0))),
            scratch_shapes=[pltpu.VMEM((M, Coutp), jnp.float32)]),
        compiler_params=pltpu.CompilerParams(
            dimension_semantics=("parallel",),
            vmem_limit_bytes=_VMEM_LIMIT),
    )(xpad, xpad, xpad, w27)
    colsum = jnp.sum(stats[0::8], axis=0)
    colsq = jnp.sum(stats[1::8], axis=0)
    return out, colsum, colsq


def _direct_ok(D, H, W, Cp, Coutp):
    """Direct-conv path: lane/sublane friendly width and VMEM-resident working set."""
    if Cp % 128 != 0 or Coutp % 128 != 0 or W % 8 != 0 or W < 8:
        return False
    slab = (H + 2) * (W + 2) * Cp * 2
    wbytes = 27 * Cp * Coutp * 2
    acc = H * W * Coutp * 4
    out = H * W * Coutp * 2
    need = 6 * slab + 2 * wbytes + acc + 2 * out + (1 << 20)
    return need <= int(0.8 * _VMEM_LIMIT)


# ---------------------------------------------------------------------------
# Kernel 3a: fused InstanceNorm affine (precomputed scale/shift) + LeakyReLU (2D rows)
# ---------------------------------------------------------------------------
def _affine_lrelu_kernel(x_ref, sc_ref, sh_ref, o_ref):
    y = x_ref[...].astype(jnp.float32) * sc_ref[...] + sh_ref[...]
    o_ref[...] = jnp.maximum(y, NEG_SLOPE * y).astype(o_ref.dtype)


def affine_lrelu_2d(x2d, scale, shift):
    """x2d: [R, Cp]; scale/shift: [Cp] f32.  Returns bf16 leaky_relu(x*scale+shift)."""
    R, Cp = x2d.shape
    cap = max(256, min(8192, (_VMEM_LIMIT // (32 * Cp)) // 16 * 16))
    ts, Rp = _split_dim(R, 16, cap)
    if Rp != R:
        x2d = jnp.pad(x2d, ((0, Rp - R), (0, 0)))
    sc = scale.astype(jnp.float32).reshape(1, Cp)
    sh = shift.astype(jnp.float32).reshape(1, Cp)
    y = pl.pallas_call(
        _affine_lrelu_kernel,
        out_shape=jax.ShapeDtypeStruct((Rp, Cp), jnp.bfloat16),
        grid_spec=pltpu.PrefetchScalarGridSpec(
            num_scalar_prefetch=0, grid=(Rp // ts,),
            in_specs=[pl.BlockSpec((ts, Cp), lambda s: (s, 0)),
                      pl.BlockSpec((1, Cp), lambda s: (0, 0)),
                      pl.BlockSpec((1, Cp), lambda s: (0, 0))],
            out_specs=pl.BlockSpec((ts, Cp), lambda s: (s, 0))),
        compiler_params=pltpu.CompilerParams(
            dimension_semantics=("parallel",),
            vmem_limit_bytes=_VMEM_LIMIT),
    )(x2d, sc, sh)
    return y[:R]


# ---------------------------------------------------------------------------
# Kernel 3b: fused affine + LeakyReLU + spatial zero-pad (feeds the direct conv)
# ---------------------------------------------------------------------------
def _affine_pad_kernel(Ho, Wo, x_ref, sc_ref, sh_ref, o_ref):
    dd = pl.program_id(0)
    nd = pl.num_programs(0)
    interior = jnp.logical_and(dd > 0, dd < nd - 1)

    @pl.when(jnp.logical_not(interior))
    def _():
        o_ref[...] = jnp.zeros_like(o_ref)

    @pl.when(interior)
    def _():
        y = x_ref[...].astype(jnp.float32) * sc_ref[...] + sh_ref[...]
        y = jnp.maximum(y, NEG_SLOPE * y)
        o_ref[...] = jnp.zeros_like(o_ref)
        o_ref[0, 1:Ho + 1, 1:Wo + 1, :] = \
            y.reshape(Ho, Wo, y.shape[-1]).astype(o_ref.dtype)


def affine_lrelu_pad(x2d, scale, shift, Do, Ho, Wo):
    """x2d: raw conv output rows (>= Do*Ho*Wo, Cp).  Returns zero-bordered normalized
    bf16 volume (Do+2, Ho+2, Wo+2, Cp) ready for conv3x3_direct."""
    Cp = x2d.shape[1]
    M = Ho * Wo
    Dp2, Hp2, Wp2 = Do + 2, Ho + 2, Wo + 2
    sc = scale.astype(jnp.float32).reshape(1, Cp)
    sh = shift.astype(jnp.float32).reshape(1, Cp)
    kern = functools.partial(_affine_pad_kernel, Ho, Wo)
    out = pl.pallas_call(
        kern,
        out_shape=jax.ShapeDtypeStruct((Dp2, Hp2, Wp2, Cp), jnp.bfloat16),
        grid_spec=pltpu.PrefetchScalarGridSpec(
            num_scalar_prefetch=0, grid=(Dp2,),
            in_specs=[
                pl.BlockSpec((M, Cp), lambda dd: (jnp.clip(dd - 1, 0, Do - 1), 0)),
                pl.BlockSpec((1, Cp), lambda dd: (0, 0)),
                pl.BlockSpec((1, Cp), lambda dd: (0, 0)),
            ],
            out_specs=pl.BlockSpec((1, Hp2, Wp2, Cp), lambda dd: (dd, 0, 0, 0))),
        compiler_params=pltpu.CompilerParams(
            dimension_semantics=("parallel",),
            vmem_limit_bytes=_VMEM_LIMIT),
    )(x2d, sc, sh)
    return out


# ---------------------------------------------------------------------------
# Layer glue (weight packing, InstanceNorm affine, fallback im2col conv)
# ---------------------------------------------------------------------------
def _w27_phys(w5, cin_phys, cout_phys):
    wp = jnp.pad(w5, ((0, 0), (0, 0), (0, 0),
                      (0, cin_phys - w5.shape[3]), (0, cout_phys - w5.shape[4])))
    return wp.reshape(27, cin_phys, cout_phys).astype(jnp.bfloat16)


def _pad_w5_cin(w5, cin_phys):
    return jnp.pad(w5, ((0, 0), (0, 0), (0, 0), (0, cin_phys - w5.shape[3]), (0, 0)))


def _in_affine(colsum, colsq, count, gamma, beta):
    """InstanceNorm (affine) folded to per-channel (scale, shift).  One-pass variance
    (E[x^2]-E[x]^2 in f32) matches the previous version; accepted per review."""
    Cp = colsum.shape[0]
    g = jnp.pad(gamma.astype(jnp.float32), (0, Cp - gamma.shape[0]))
    b = jnp.pad(beta.astype(jnp.float32), (0, Cp - beta.shape[0]))
    mean = colsum / count
    var = jnp.maximum(colsq / count - mean * mean, 0.0)
    inv = jax.lax.rsqrt(var + IN_EPS)
    scale = g * inv
    shift = b - mean * scale
    return scale, shift


def conv_im2col(x, w5, stride):
    """Fallback 3x3x3 conv (XLA im2col + Pallas matmul) — only used for the strided
    bottleneck conv and tiny-width layers where the direct path does not apply."""
    D, H, W, Cin = x.shape
    sd, sh_, sw = stride
    Cout = w5.shape[-1]
    xp = jnp.pad(x.astype(jnp.bfloat16), ((1, 1), (1, 1), (1, 1), (0, 0)))
    Do = (D + 2 - 3) // sd + 1
    Ho = (H + 2 - 3) // sh_ + 1
    Wo = (W + 2 - 3) // sw + 1
    cols = []
    for kd in range(3):
        for kh in range(3):
            for kw in range(3):
                cols.append(jax.lax.slice(
                    xp, (kd, kh, kw, 0),
                    (kd + (Do - 1) * sd + 1, kh + (Ho - 1) * sh_ + 1,
                     kw + (Wo - 1) * sw + 1, Cin),
                    (sd, sh_, sw, 1)))
    a = jnp.stack(cols, axis=-2).reshape(Do * Ho * Wo, 27 * Cin)
    wm = w5.reshape(27 * Cin, Cout)
    out, colsum, colsq = matmul_pallas(a, wm, with_stats=True)
    return out, colsum, colsq, (Do, Ho, Wo)


def _conv_raw(x_dhwc, w5, cout_log, stride=(1, 1, 1)):
    """Conv on a normalized channels-last input (already channel-padded).
    Returns (raw2d rows>=S x Coutp bf16, colsum, colsumsq, (Do,Ho,Wo), Coutp)."""
    D, H, W, Cp = x_dhwc.shape
    Coutp = _round_up(cout_log, 128)
    if stride == (1, 1, 1) and _direct_ok(D, H, W, Cp, Coutp):
        xpad = jnp.pad(x_dhwc.astype(jnp.bfloat16), ((1, 1), (1, 1), (1, 1), (0, 0)))
        out, cs, cq = conv3x3_direct(xpad, _w27_phys(w5, Cp, Coutp))
        return out, cs, cq, (D, H, W), Coutp
    out, cs, cq, oshape = conv_im2col(x_dhwc, _pad_w5_cin(w5, Cp), stride)
    return out[:, :Coutp], cs[:Coutp], cq[:Coutp], oshape, Coutp


def _conv_raw_from_raw(prev_raw, prev_scale, prev_shift, shape, w5, cout_log):
    """Second conv of a block: normalization of the previous raw output is fused with the
    next conv's zero-padding (affine_lrelu_pad) when the direct path applies."""
    D, H, W = shape
    Cp = prev_raw.shape[1]
    Coutp = _round_up(cout_log, 128)
    if _direct_ok(D, H, W, Cp, Coutp):
        xpad = affine_lrelu_pad(prev_raw, prev_scale, prev_shift, D, H, W)
        out, cs, cq = conv3x3_direct(xpad, _w27_phys(w5, Cp, Coutp))
        return out, cs, cq, (D, H, W), Coutp
    S = D * H * W
    xn = affine_lrelu_2d(prev_raw, prev_scale, prev_shift)[:S].reshape(D, H, W, Cp)
    out, cs, cq, oshape = conv_im2col(xn, _pad_w5_cin(w5, Cp), (1, 1, 1))
    return out[:, :Coutp], cs[:Coutp], cq[:Coutp], oshape, Coutp


def conv_transpose3d_raw(x_rows, in_shape, cin_log, w, stride):
    """ConvTranspose3d with kernel_size == stride, padding=0, bias=False.
    x_rows: normalized activation as 2D rows (>= S, Cp) bf16 (channel-padded)."""
    D, H, W = in_shape
    Cp = x_rows.shape[1]
    sd, sh_, sw = stride
    cout = w.shape[-1]
    S = D * H * W
    wm = jnp.pad(w, ((0, Cp - cin_log), (0, 0), (0, 0), (0, 0), (0, 0))) \
            .reshape(Cp, sd * sh_ * sw * cout)
    y = matmul_pallas(x_rows, wm, with_stats=False)     # stats epilogue skipped here
    n = sd * sh_ * sw * cout
    up = y[:S, :n].reshape(D, H, W, sd, sh_, sw, cout)
    # TODO(synk): fuse this (D,sd)(H,sh)(W,sw) interleave into the Pallas output store.
    up = jnp.transpose(up, (0, 3, 1, 4, 2, 5, 6)).reshape(D * sd, H * sh_, W * sw, cout)
    return up


# ---------------------------------------------------------------------------
# Deterministic parameter construction (synthetic; no checkpoint loading)
# ---------------------------------------------------------------------------
def _conv_block_params(key, cin, cout):
    k1, k2, k3, k4 = jax.random.split(key, 4)
    fan_in = cin * 27
    return {
        "w": jax.random.normal(k1, (3, 3, 3, cin, cout), jnp.float32)
             * jnp.sqrt(2.0 / fan_in),
        # bias kept for structural fidelity but mathematically cancelled by IN -> unused
        "b": 0.01 * jax.random.normal(k2, (cout,), jnp.float32),
        "gamma": 1.0 + 0.1 * jax.random.normal(k3, (cout,), jnp.float32),
        "beta": 0.01 * jax.random.normal(k4, (cout,), jnp.float32),
    }


def _tu_params(key, cin, cout, stride):
    sd, sh_, sw = stride
    return jax.random.normal(key, (cin, sd, sh_, sw, cout), jnp.float32) \
        * jnp.sqrt(2.0 / (cin * sd * sh_ * sw))


def init_center_back_params(key):
    keys = iter(jax.random.split(key, 16))
    p = {}
    p["ctx0"] = _conv_block_params(next(keys), 320, 320)
    p["ctx1"] = _conv_block_params(next(keys), 320, 320)
    tu_specs = [(320, 320, (1, 2, 2)), (320, 256, (2, 2, 2)),
                (256, 128, (2, 2, 2)), (128, 64, (2, 2, 2))]
    p["tu"] = [_tu_params(next(keys), ci, co, s) for ci, co, s in tu_specs]
    loc_specs = [(640, 320), (512, 256), (256, 128)]
    p["loc"] = [[_conv_block_params(next(keys), cin, cout),
                 _conv_block_params(next(keys), cout, cout)]
                for cin, cout in loc_specs]
    p["loc3_0"] = _conv_block_params(next(keys), 128, 64)
    return p


# ---------------------------------------------------------------------------
# center_back.forward
# ---------------------------------------------------------------------------
TU_STRIDES = ((1, 2, 2), (2, 2, 2), (2, 2, 2), (2, 2, 2))


def center_back_forward(x_ncdhw, skips_ncdhw, params):
    """x_ncdhw: (N, 320, D, H, W).  skips_ncdhw: list of 4 NCDHW tensors equal to
    self.skips[::-1][:4] (channels 320, 256, 128, 64 at 1x, 2x, 4x, 8x spatial).
    Returns (N, 64, 8D, 8H, 8W) float32."""
    loc_cout = (320, 256, 128)
    outs = []
    for n in range(x_ncdhw.shape[0]):
        x = jnp.transpose(x_ncdhw[n], (1, 2, 3, 0))               # NCDHW -> DHWC

        # ---- final_context_layer (bottleneck block) ----
        raw, cs, cq, shape, _ = _conv_raw(x, params["ctx0"]["w"], 320, stride=(1, 2, 2))
        S = shape[0] * shape[1] * shape[2]
        sc, sh = _in_affine(cs, cq, S, params["ctx0"]["gamma"], params["ctx0"]["beta"])
        raw, cs, cq, shape, _ = _conv_raw_from_raw(raw, sc, sh, shape,
                                                   params["ctx1"]["w"], 320)
        sc, sh = _in_affine(cs, cq, S, params["ctx1"]["gamma"], params["ctx1"]["beta"])
        cur_rows = affine_lrelu_2d(raw, sc, sh)
        cur_shape, cur_clog = shape, 320

        # ---- decoder stages 0..2 ----
        for u in range(3):
            up = conv_transpose3d_raw(cur_rows, cur_shape, cur_clog,
                                      params["tu"][u], TU_STRIDES[u])
            skip = jnp.transpose(skips_ncdhw[u][n], (1, 2, 3, 0)).astype(jnp.bfloat16)
            cat = jnp.concatenate([up, skip], axis=-1)            # torch.cat((x, skip), dim=1)
            p0, p1 = params["loc"][u]
            raw, cs, cq, shape, _ = _conv_raw(cat, p0["w"], loc_cout[u])
            S = shape[0] * shape[1] * shape[2]
            sc, sh = _in_affine(cs, cq, S, p0["gamma"], p0["beta"])
            raw, cs, cq, shape, _ = _conv_raw_from_raw(raw, sc, sh, shape,
                                                       p1["w"], loc_cout[u])
            sc, sh = _in_affine(cs, cq, S, p1["gamma"], p1["beta"])
            cur_rows = affine_lrelu_2d(raw, sc, sh)
            cur_shape, cur_clog = shape, loc_cout[u]

        # ---- tu_4 + conv_blocks_localization[3][0] ----
        up = conv_transpose3d_raw(cur_rows, cur_shape, cur_clog,
                                  params["tu"][3], TU_STRIDES[3])
        skip = jnp.transpose(skips_ncdhw[3][n], (1, 2, 3, 0)).astype(jnp.bfloat16)
        cat = jnp.concatenate([up, skip], axis=-1)
        raw, cs, cq, shape, _ = _conv_raw(cat, params["loc3_0"]["w"], 64)
        S = shape[0] * shape[1] * shape[2]
        sc, sh = _in_affine(cs, cq, S, params["loc3_0"]["gamma"], params["loc3_0"]["beta"])
        y = affine_lrelu_2d(raw, sc, sh)[:S, :64]
        out_n = jnp.transpose(y.reshape(shape[0], shape[1], shape[2], 64),
                              (3, 0, 1, 2)).astype(jnp.float32)
        outs.append(out_n)
    return jnp.stack(outs, axis=0)


# ---------------------------------------------------------------------------
# quick self-checks of the Pallas kernels against jnp references
# ---------------------------------------------------------------------------
def _self_check():
    k = jax.random.PRNGKey(42)
    k1, k2, k3, k4, k5, k6, k7 = jax.random.split(k, 7)

    # matmul (+/- fused column stats)
    a = jax.random.normal(k1, (40, 200), jnp.float32)
    b = jax.random.normal(k2, (200, 70), jnp.float32)
    out_p, cs, cq = matmul_pallas(a, b, with_stats=True)
    ref = (a.astype(jnp.bfloat16).astype(jnp.float32)
           @ b.astype(jnp.bfloat16).astype(jnp.float32))
    assert jnp.allclose(out_p[:40, :70].astype(jnp.float32), ref,
                        rtol=2e-2, atol=2e-2), "matmul mismatch"
    assert jnp.allclose(cs[:70], ref.sum(axis=0), rtol=1e-2, atol=1.0), "colsum mismatch"
    assert jnp.allclose(cq[:70], (ref * ref).sum(axis=0), rtol=1e-2, atol=10.0), "colsq mismatch"
    out_ns = matmul_pallas(a, b, with_stats=False)
    assert jnp.allclose(out_ns[:40, :70].astype(jnp.float32), ref,
                        rtol=2e-2, atol=2e-2), "matmul(no stats) mismatch"

    # direct 3x3x3 conv kernel
    D, H, W, C, Co = 3, 8, 8, 128, 128
    x = jax.random.normal(k3, (D, H, W, C), jnp.float32).astype(jnp.bfloat16)
    w = (0.05 * jax.random.normal(k4, (3, 3, 3, C, Co), jnp.float32)).astype(jnp.bfloat16)
    xpad = jnp.pad(x, ((1, 1), (1, 1), (1, 1), (0, 0)))
    out, ccs, ccq = conv3x3_direct(xpad, w.reshape(27, C, Co))
    xf, wf = xpad.astype(jnp.float32), w.reshape(27, C, Co).astype(jnp.float32)
    refc = jnp.zeros((D, H, W, Co), jnp.float32)
    t = 0
    for kd in range(3):
        for kh in range(3):
            for kw in range(3):
                refc = refc + jnp.einsum("dhwc,cn->dhwn",
                                         xf[kd:kd + D, kh:kh + H, kw:kw + W, :], wf[t])
                t += 1
    refc = refc.reshape(D * H * W, Co)
    assert jnp.allclose(out.astype(jnp.float32), refc, rtol=2e-2, atol=2e-1), "conv3x3 mismatch"
    assert jnp.allclose(ccs, refc.sum(0), rtol=2e-2, atol=2.0), "conv colsum mismatch"
    assert jnp.allclose(ccq, (refc * refc).sum(0), rtol=2e-2, atol=20.0), "conv colsq mismatch"

    # fused affine + LeakyReLU (2D and padded-volume forms)
    Dp, Hp, Wp, Cc = 2, 8, 8, 128
    xr = jax.random.normal(k5, (Dp * Hp * Wp, Cc), jnp.float32)
    gamma = 1.0 + 0.1 * jax.random.normal(k6, (Cc,), jnp.float32)
    beta = 0.1 * jax.random.normal(k7, (Cc,), jnp.float32)
    mu, var = xr.mean(0), xr.var(0)
    scale = gamma * jax.lax.rsqrt(var + IN_EPS)
    shift = beta - mu * scale
    xb = xr.astype(jnp.bfloat16)
    yb = xb.astype(jnp.float32) * scale + shift
    ref2 = jnp.maximum(yb, NEG_SLOPE * yb)
    got2 = affine_lrelu_2d(xb, scale, shift).astype(jnp.float32)
    assert jnp.allclose(got2, ref2, rtol=2e-2, atol=2e-2), "affine_lrelu_2d mismatch"
    gotp = affine_lrelu_pad(xb, scale, shift, Dp, Hp, Wp).astype(jnp.float32)
    refp = jnp.pad(ref2.reshape(Dp, Hp, Wp, Cc), ((1, 1), (1, 1), (1, 1), (0, 0)))
    assert jnp.allclose(gotp, refp, rtol=2e-2, atol=2e-2), "affine_lrelu_pad mismatch"


if __name__ == "__main__":
    _self_check()

    key = jax.random.PRNGKey(0)
    kp, kx, k0, k1, k2, k3 = jax.random.split(key, 6)
    params = init_center_back_params(kp)

    # small-but-consistent shapes: bottleneck-level input (N, 320, D, H, W)
    N, D, H, W = 1, 2, 4, 4
    x = jax.random.normal(kx, (N, 320, D, H, W), jnp.float32)
    skips = [  # = self.skips[::-1][:4]
        jax.random.normal(k0, (N, 320, D, H, W), jnp.float32),
        jax.random.normal(k1, (N, 256, 2 * D, 2 * H, 2 * W), jnp.float32),
        jax.random.normal(k2, (N, 128, 4 * D, 4 * H, 4 * W), jnp.float32),
        jax.random.normal(k3, (N, 64, 8 * D, 8 * H, 8 * W), jnp.float32),
    ]

    fwd = jax.jit(center_back_forward)
    out = jax.block_until_ready(fwd(x, skips, params))

    assert out.shape == (N, 64, 8 * D, 8 * H, 8 * W), out.shape
    assert bool(jnp.all(jnp.isfinite(out)))
    print("KERNEL_OK")
</pallas_src>

<mosaic_0001>
module attributes {stable_mosaic.version = 11 : i64} {
  func.func @_mm_stats_kernel(%arg0: i32, %arg1: i32, %arg2: i32, %arg3: memref<48x256xbf16, #tpu.memory_space<vmem>>, %arg4: memref<256x128xbf16, #tpu.memory_space<vmem>>, %arg5: memref<48x128xbf16, #tpu.memory_space<vmem>>, %arg6: memref<8x128xf32, #tpu.memory_space<vmem>>, %arg7: memref<48x128xf32, #tpu.memory_space<vmem>>) attributes {dimension_semantics = [#tpu.dimension_semantics<parallel>, #tpu.dimension_semantics<parallel>, #tpu.dimension_semantics<arbitrary>], iteration_bounds = array<i64: 1, 1, 1>, scalar_prefetch = 0 : i64, scratch_operands = 1 : i64, tpu.core_type = #tpu.core_type<tc>, window_params = [{transform_indices = @transform_0, window_bounds = array<i64: 48, 256>}, {transform_indices = @transform_1, window_bounds = array<i64: 256, 128>}, {transform_indices = @transform_2, window_bounds = array<i64: 48, 128>}, {transform_indices = @transform_3, window_bounds = array<i64: 8, 128>}]} {
    %c0_i32 = arith.constant 0 : i32
    %0 = arith.cmpi eq, %arg2, %c0_i32 : i32
    %1 = arith.extui %0 : i1 to i32
    %c0_i32_0 = arith.constant 0 : i32
    %2 = arith.cmpi ne, %1, %c0_i32_0 : i32
    scf.if %2 {
      %cst_10 = arith.constant 0.000000e+00 : f32
      %12 = vector.broadcast %cst_10 : f32 to vector<48x128xf32>
      %c0_11 = arith.constant 0 : index
      %c0_12 = arith.constant 0 : index
      %13 = vector.load %arg7[%c0_11, %c0_12] : memref<48x128xf32, #tpu.memory_space<vmem>>, vector<48x128xf32>
      tpu.vector_store %arg7[%c0_11, %c0_12], %12 {strides = array<i32>} : memref<48x128xf32, #tpu.memory_space<vmem>>, vector<48x128xf32>,
    } else {
    }
    %c0 = arith.constant 0 : index
    %c0_1 = arith.constant 0 : index
    %3 = vector.load %arg7[%c0, %c0_1] : memref<48x128xf32, #tpu.memory_space<vmem>>, vector<48x128xf32>
    %c0_2 = arith.constant 0 : index
    %c0_3 = arith.constant 0 : index
    %4 = vector.load %arg3[%c0_2, %c0_3] : memref<48x256xbf16, #tpu.memory_space<vmem>>, vector<48x256xbf16>
    %c0_4 = arith.constant 0 : index
    %c0_5 = arith.constant 0 : index
    %5 = vector.load %arg4[%c0_4, %c0_5] : memref<256x128xbf16, #tpu.memory_space<vmem>>, vector<256x128xbf16>
    %cst = arith.constant dense<0.000000e+00> : vector<48x128xf32>
    %6 = tpu.matmul %4, %5, %cst {dimension_numbers = #tpu.dot_dimension_numbers<[1], [0], [0], [1], [0, 0, 1, 1], [], []>} : vector<48x256xbf16>, vector<256x128xbf16>, vector<48x128xf32> -> vector<48x128xf32>
    %7 = arith.addf %3, %6 : vector<48x128xf32>
    %c0_6 = arith.constant 0 : index
    %c0_7 = arith.constant 0 : index
    %8 = vector.load %arg7[%c0_6, %c0_7] : memref<48x128xf32, #tpu.memory_space<vmem>>, vector<48x128xf32>
    tpu.vector_store %arg7[%c0_6, %c0_7], %7 {strides = array<i32>} : memref<48x128xf32, #tpu.memory_space<vmem>>, vector<48x128xf32>,
    %c0_i32_8 = arith.constant 0 : i32
    %9 = arith.cmpi eq, %arg2, %c0_i32_8 : i32
    %10 = arith.extui %9 : i1 to i32
    %c0_i32_9 = arith.constant 0 : i32
    %11 = arith.cmpi ne, %10, %c0_i32_9 : i32
    scf.if %11 {
      %c0_10 = arith.constant 0 : index
      %c0_11 = arith.constant 0 : index
      %12 = vector.load %arg7[%c0_10, %c0_11] : memref<48x128xf32, #tpu.memory_space<vmem>>, vector<48x128xf32>
      %13 = arith.truncf %12 : vector<48x128xf32> to vector<48x128xbf16>
      %c0_12 = arith.constant 0 : index
      %c0_13 = arith.constant 0 : index
      %14 = vector.load %arg5[%c0_12, %c0_13] : memref<48x128xbf16, #tpu.memory_space<vmem>>, vector<48x128xbf16>
      tpu.vector_store %arg5[%c0_12, %c0_13], %13 {strides = array<i32>} : memref<48x128xbf16, #tpu.memory_space<vmem>>, vector<48x128xbf16>,
      %cst_14 = arith.constant 0.000000e+00 : f32
      %15 = vector.broadcast %cst_14 : f32 to vector<8x128xf32>
      %c0_15 = arith.constant 0 : index
      %c0_16 = arith.constant 0 : index
      %16 = vector.load %arg6[%c0_15, %c0_16] : memref<8x128xf32, #tpu.memory_space<vmem>>, vector<8x128xf32>
      tpu.vector_store %arg6[%c0_15, %c0_16], %15 {strides = array<i32>} : memref<8x128xf32, #tpu.memory_space<vmem>>, vector<8x128xf32>,
      %cst_17 = arith.constant dense<0.000000e+00> : vector<128xf32>
      %17 = vector.multi_reduction <add>, %12, %cst_17 [0] : vector<48x128xf32> to vector<128xf32>
      %18 = vector.shape_cast %17 : vector<128xf32> to vector<1x128xf32>
      %c0_18 = arith.constant 0 : index
      %c0_19 = arith.constant 0 : index
      %19 = vector.load %arg6[%c0_18, %c0_19] : memref<8x128xf32, #tpu.memory_space<vmem>>, vector<1x128xf32>
      tpu.vector_store %arg6[%c0_18, %c0_19], %18 {strides = array<i32>} : memref<8x128xf32, #tpu.memory_space<vmem>>, vector<1x128xf32>,
      %20 = arith.mulf %12, %12 : vector<48x128xf32>
      %cst_20 = arith.constant dense<0.000000e+00> : vector<128xf32>
      %21 = vector.multi_reduction <add>, %20, %cst_20 [0] : vector<48x128xf32> to vector<128xf32>
      %22 = vector.shape_cast %21 : vector<128xf32> to vector<1x128xf32>
      %c1 = arith.constant 1 : index
      %c0_21 = arith.constant 0 : index
      %23 = vector.load %arg6[%c1, %c0_21] : memref<8x128xf32, #tpu.memory_space<vmem>>, vector<1x128xf32>
      tpu.vector_store %arg6[%c1, %c0_21], %22 {strides = array<i32>} : memref<8x128xf32, #tpu.memory_space<vmem>>, vector<1x128xf32>,
    } else {
    }
    return
  }
  func.func @transform_0(%arg0: i32, %arg1: i32, %arg2: i32) -> (i32, i32) {
    %c0_i32 = arith.constant 0 : i32
    return %arg0, %arg2 : i32, i32
  }
  func.func @transform_1(%arg0: i32, %arg1: i32, %arg2: i32) -> (i32, i32) {
    %c0_i32 = arith.constant 0 : i32
    return %arg2, %arg1 : i32, i32
  }
  func.func @transform_2(%arg0: i32, %arg1: i32, %arg2: i32) -> (i32, i32) {
    %c0_i32 = arith.constant 0 : i32
    return %arg0, %arg1 : i32, i32
  }
  func.func @transform_3(%arg0: i32, %arg1: i32, %arg2: i32) -> (i32, i32) {
    %c0_i32 = arith.constant 0 : i32
    return %arg0, %arg1 : i32, i32
  }
}

</mosaic_0001>

<llo_original>
// kernel: tpu_custom_call.1
$region0: #{tpu_custom_call.1}
  #allocation0 [shape = 'u32[]', space=smem, size = 0x4, offset = 0x4, fixed_abs, tag = 'smem constant byte address 0x4 - core index']
  #allocation1 [shape = 'u32[144,128]{1,0:T(1,128)}', space=vmem, size = 0x12000, scoped, tag = 'internal scratch']
  #allocation2 [shape = 'f32[48,128]{1,0:T(8,128)}', space=vmem, size = 0x6000, scoped, tag = 'scratch operand']
  %s0 = inlined_call_operand.hbm [shape: bf16[48,256], index: 0, kind: input, shape index: {}]
  %s1 = inlined_call_operand.hbm [shape: bf16[256,128], index: 1, kind: input, shape index: {}]
  %s2 = inlined_call_operand.hbm [shape: bf16[48,128], index: 2, kind: output, shape index: {0}]
  %s3 = inlined_call_operand.hbm [shape: f32[8,128], index: 3, kind: output, shape index: {1}]
  %4 = xla_tuple %s2, %s3
  %s5 = sld [smem:[#allocation0]]
  $region42: #{tpu_custom_call.1} parent=0
    _
  %s7 = ssub.s32 1, %s5
  %s8 = scalar_select 0, %s7, %s5
  $region1: #{tpu_custom_call.1} parent=0
    #allocation3 [shape = 'u8[24576]{0}', space=vmem, size = 0x6000, scoped, tag = 'input window, operand 0, single buffered']
    #allocation4 [shape = 's32[1]{0}', space=sflag, size = 0x4, scoped, tag = 'scoped memory for tpu_custom_call.1']
    #allocation5 [shape = 's32[1]{0}', space=sflag, size = 0x4, scoped, tag = 'scoped memory for tpu_custom_call.1']
    #allocation6 [shape = 'u8[65536]{0}', space=vmem, size = 0x10000, scoped, tag = 'input window, operand 1, single buffered']
    #allocation7 [shape = 's32[1]{0}', space=sflag, size = 0x4, scoped, tag = 'scoped memory for tpu_custom_call.1']
    #allocation8 [shape = 'u8[12288]{0}', space=vmem, size = 0x3000, scoped, tag = 'output window, operand 0, single buffered']
    #allocation9 [shape = 'u8[4096]{0}', space=vmem, size = 0x1000, scoped, tag = 'output window, operand 1, single buffered']
    #allocation10 [shape = 's32[1]{0}', space=sflag, size = 0x4, scoped, tag = 'scoped memory for tpu_custom_call.1']
    %9 = vsyncpa [#allocation4], 0
    %10 = vsyncpa [#allocation7], 0
    %11 = vsyncpa [#allocation5], 0
    %12 = vsyncpa [#allocation10], 0
    // Predicated region
    $region2: #{tpu_custom_call.1} parent=1 // pred_check
      _
    $region3: #{tpu_custom_call.1} parent=1 // pred_check_branch
      %14 = sbr.rel (0) target = $region5
    $region4: #{tpu_custom_call.1} parent=1 // pred_region
      %s16 = ssub.s32 768, 768
      %17 = vsyncadd [#allocation4], %s16
      %s18 = sshll.u32 [#allocation3], 4
      %s19 = int_to_ptr.vmem [resolvable:$true] %s18
      %24 = dma.hbm_to_vmem [thread:$0]  %s0, 768, %s19, [#allocation4], 128, 128, 8
    $region5: #{tpu_custom_call.1} parent=1 // pred_fallthru
      _
    // Predicated region
    $region6: #{tpu_custom_call.1} parent=1 // pred_check
      _
    $region7: #{tpu_custom_call.1} parent=1 // pred_check_branch
      %26 = sbr.rel (0) target = $region9
    $region8: #{tpu_custom_call.1} parent=1 // pred_region
      %s28 = ssub.s32 2048, 2048
      %29 = vsyncadd [#allocation7], %s28
      %s30 = sshll.u32 [#allocation6], 4
      %s31 = int_to_ptr.vmem [resolvable:$true] %s30
      %36 = dma.hbm_to_vmem [thread:$0]  %s1, 2048, %s31, [#allocation7], 64, 64, 4
    $region9: #{tpu_custom_call.1} parent=1 // pred_fallthru
      _
    // Predicated region
    $region10: #{tpu_custom_call.1} parent=1 // pred_check
      _
    $region11: #{tpu_custom_call.1} parent=1 // pred_check_branch
      %38 = sbr.rel (0) target = $region13
    $region12: #{tpu_custom_call.1} parent=1 // pred_region
      %39 = dma.done [#allocation4], 768
    $region13: #{tpu_custom_call.1} parent=1 // pred_fallthru
      _
    // Predicated region
    $region14: #{tpu_custom_call.1} parent=1 // pred_check
      _
    $region15: #{tpu_custom_call.1} parent=1 // pred_check_branch
      %41 = sbr.rel (0) target = $region17
    $region16: #{tpu_custom_call.1} parent=1 // pred_region
      %42 = dma.done [#allocation7], 2048
    $region17: #{tpu_custom_call.1} parent=1 // pred_fallthru
      _
    %p44 = scmp.eq.s32.totalorder 0, 0
    // Predicated region
    $region18: #{tpu_custom_call.1} parent=1 // pred_check
      %p45 = pneg %p44
    $region19: #{tpu_custom_call.1} parent=1 // pred_check_branch
      %47 = sbr.rel (%p45) target = $region21
    $region20: #{tpu_custom_call.1} parent=1 // pred_region
      %48 = vst [vmem:[#allocation2] sm:$0xff] 0.0
      %49 = vst [vmem:[#allocation2 + $0x8] sm:$0xff] 0.0
      %50 = vst [vmem:[#allocation2 + $0x10] sm:$0xff] 0.0
      %51 = vst [vmem:[#allocation2 + $0x18] sm:$0xff] 0.0
      %52 = vst [vmem:[#allocation2 + $0x20] sm:$0xff] 0.0
      %53 = vst [vmem:[#allocation2 + $0x28] sm:$0xff] 0.0
    $region21: #{tpu_custom_call.1} parent=1 // pred_fallthru
      _
    %v54 = vld [vmem:[#allocation2] sm:$0xff]
    %v55 = vld [vmem:[#allocation2 + $0x8] sm:$0xff]
    %v56 = vld [vmem:[#allocation2 + $0x10] sm:$0xff]
    %v57 = vld [vmem:[#allocation2 + $0x18] sm:$0xff]
    %v58 = vld [vmem:[#allocation2 + $0x20] sm:$0xff]
    %v59 = vld [vmem:[#allocation2 + $0x28] sm:$0xff]
    %v60 = vld [vmem:[#allocation3] sm:$0xff]
    %v61 = vld [vmem:[#allocation3 + $0x8] sm:$0xff]
    %v62 = vld [vmem:[#allocation3 + $0x10] sm:$0xff]
    %v63 = vld [vmem:[#allocation3 + $0x18] sm:$0xff]
    %v64 = vld [vmem:[#allocation3 + $0x20] sm:$0xff]
    %v65 = vld [vmem:[#allocation3 + $0x28] sm:$0xff]
    %v66 = vld [vmem:[#allocation6] sm:$0xf]
    %v67 = vld [vmem:[#allocation6 + $0x4] sm:$0xf]
    %v68 = vld [vmem:[#allocation6 + $0x8] sm:$0xf]
    %v69 = vld [vmem:[#allocation6 + $0xc] sm:$0xf]
    %v70 = vld [vmem:[#allocation6 + $0x10] sm:$0xf]
    %v71 = vld [vmem:[#allocation6 + $0x14] sm:$0xf]
    %v72 = vld [vmem:[#allocation6 + $0x18] sm:$0xf]
    %v73 = vld [vmem:[#allocation6 + $0x1c] sm:$0xf]
    %v74 = vld [vmem:[#allocation6 + $0x20] sm:$0xf]
    %v75 = vld [vmem:[#allocation6 + $0x24] sm:$0xf]
    %v76 = vld [vmem:[#allocation6 + $0x28] sm:$0xf]
    %v77 = vld [vmem:[#allocation6 + $0x2c] sm:$0xf]
    %v78 = vld [vmem:[#allocation6 + $0x30] sm:$0xf]
    %v79 = vld [vmem:[#allocation6 + $0x34] sm:$0xf]
    %v80 = vld [vmem:[#allocation6 + $0x38] sm:$0xf]
    %v81 = vld [vmem:[#allocation6 + $0x3c] sm:$0xf]
    %v82 = vld [vmem:[#allocation6 + $0x40] sm:$0xf]
    %v83 = vld [vmem:[#allocation6 + $0x44] sm:$0xf]
    %v84 = vld [vmem:[#allocation6 + $0x48] sm:$0xf]
    %v85 = vld [vmem:[#allocation6 + $0x4c] sm:$0xf]
    %v86 = vld [vmem:[#allocation6 + $0x50] sm:$0xf]
    %v87 = vld [vmem:[#allocation6 + $0x54] sm:$0xf]
    %v88 = vld [vmem:[#allocation6 + $0x58] sm:$0xf]
    %v89 = vld [vmem:[#allocation6 + $0x5c] sm:$0xf]
    %v90 = vld [vmem:[#allocation6 + $0x60] sm:$0xf]
    %v91 = vld [vmem:[#allocation6 + $0x64] sm:$0xf]
    %v92 = vld [vmem:[#allocation6 + $0x68] sm:$0xf]
    %v93 = vld [vmem:[#allocation6 + $0x6c] sm:$0xf]
    %v94 = vld [vmem:[#allocation6 + $0x70] sm:$0xf]
    %v95 = vld [vmem:[#allocation6 + $0x74] sm:$0xf]
    %v96 = vld [vmem:[#allocation6 + $0x78] sm:$0xf]
    %v97 = vld [vmem:[#allocation6 + $0x7c] sm:$0xf]
    %v104 = vunpack.c.l.b16 %v60
    %v105 = vunpack.c.h.b16 %v60
    %v106 = vunpack.c.l.b16 %v61
    %v107 = vunpack.c.h.b16 %v61
    %v108 = vunpack.c.l.b16 %v62
    %v109 = vunpack.c.h.b16 %v62
    %v110 = vunpack.c.l.b16 %v63
    %v111 = vunpack.c.h.b16 %v63
    %v112 = vunpack.c.l.b16 %v64
    %v113 = vunpack.c.h.b16 %v64
    %v114 = vunpack.c.l.b16 %v65
    %v115 = vunpack.c.h.b16 %v65
    %v116 = vpack.c.b16 %v106, %v104
    %v117 = vpack.c.b16 %v107, %v105
    %v118 = vpack.c.b16 %v110, %v108
    %v119 = vpack.c.b16 %v111, %v109
    %v120 = vpack.c.b16 %v114, %v112
    %v121 = vpack.c.b16 %v115, %v113
    %v160 = vunpack.c.l.b16 %v66
    %v161 = vunpack.c.l.b16 %v67
    %v162 = vunpack.c.l.b16 %v68
    %v163 = vunpack.c.l.b16 %v69
    %v164 = vunpack.c.l.b16 %v70
    %v165 = vunpack.c.l.b16 %v71
    %v166 = vunpack.c.l.b16 %v72
    %v167 = vunpack.c.l.b16 %v73
    %v168 = vunpack.c.l.b16 %v74
    %v169 = vunpack.c.l.b16 %v75
    %v170 = vunpack.c.l.b16 %v76
    %v171 = vunpack.c.l.b16 %v77
    %v172 = vunpack.c.l.b16 %v78
    %v173 = vunpack.c.l.b16 %v79
    %v174 = vunpack.c.l.b16 %v80
    %v175 = vunpack.c.l.b16 %v81
    %v176 = vunpack.c.l.b16 %v82
    %v177 = vunpack.c.l.b16 %v83
    %v178 = vunpack.c.l.b16 %v84
    %v179 = vunpack.c.l.b16 %v85
    %v180 = vunpack.c.l.b16 %v86
    %v181 = vunpack.c.l.b16 %v87
    %v182 = vunpack.c.l.b16 %v88
    %v183 = vunpack.c.l.b16 %v89
    %v184 = vunpack.c.l.b16 %v90
    %v185 = vunpack.c.l.b16 %v91
    %v186 = vunpack.c.l.b16 %v92
    %v187 = vunpack.c.l.b16 %v93
    %v188 = vunpack.c.l.b16 %v94
    %v189 = vunpack.c.l.b16 %v95
    %v190 = vunpack.c.l.b16 %v96
    %v191 = vunpack.c.l.b16 %v97
    %v192 = vpack.c.b16 %v161, %v160
    %v193 = vpack.c.b16 %v163, %v162
    %v194 = vpack.c.b16 %v165, %v164
    %v195 = vpack.c.b16 %v167, %v166
    %v196 = vpack.c.b16 %v169, %v168
    %v197 = vpack.c.b16 %v171, %v170
    %v198 = vpack.c.b16 %v173, %v172
    %v199 = vpack.c.b16 %v175, %v174
    %v200 = vpack.c.b16 %v177, %v176
    %v201 = vpack.c.b16 %v179, %v178
    %v202 = vpack.c.b16 %v181, %v180
    %v203 = vpack.c.b16 %v183, %v182
    %v204 = vpack.c.b16 %v185, %v184
    %v205 = vpack.c.b16 %v187, %v186
    %v206 = vpack.c.b16 %v189, %v188
    %v207 = vpack.c.b16 %v191, %v190
    %224 = vmatprep.subr.bf16.mxu0 0
    %225 = vmatpush1.bf16.msra.mxu0 %v192
    %226 = vmatprep.subr.bf16.mxu0 0
    %227 = vmatpush1.bf16.msra.mxu0 %v193
    %228 = vmatprep.subr.bf16.mxu0 0
    %229 = vmatpush1.bf16.msra.mxu0 %v194
    %230 = vmatprep.subr.bf16.mxu0 0
    %231 = vmatpush1.bf16.msra.mxu0 %v195
    %232 = vmatprep.subr.bf16.mxu0 0
    %233 = vmatpush1.bf16.msra.mxu0 %v196
    %234 = vmatprep.subr.bf16.mxu0 0
    %235 = vmatpush1.bf16.msra.mxu0 %v197
    %236 = vmatprep.subr.bf16.mxu0 0
    %237 = vmatpush1.bf16.msra.mxu0 %v198
    %238 = vmatprep.subr.bf16.mxu0 0
    %239 = vmatpush1.bf16.msra.mxu0 %v199
    %240 = vmatprep.subr.bf16.mxu0 0
    %241 = vmatpush1.bf16.msra.mxu0 %v200
    %242 = vmatprep.subr.bf16.mxu0 0
    %243 = vmatpush1.bf16.msra.mxu0 %v201
    %244 = vmatprep.subr.bf16.mxu0 0
    %245 = vmatpush1.bf16.msra.mxu0 %v202
    %246 = vmatprep.subr.bf16.mxu0 0
    %247 = vmatpush1.bf16.msra.mxu0 %v203
    %248 = vmatprep.subr.bf16.mxu0 0
    %249 = vmatpush1.bf16.msra.mxu0 %v204
    %250 = vmatprep.subr.bf16.mxu0 0
    %251 = vmatpush1.bf16.msra.mxu0 %v205
    %252 = vmatprep.subr.bf16.mxu0 0
    %253 = vmatpush1.bf16.msra.mxu0 %v206
    %254 = vmatprep.subr.bf16.mxu0 0
    %255 = vmatpush1.bf16.msra.mxu0 %v207
    %256 = vmatprep.mubr.bf16.mxu0 %v117
    %257 = vmatmul.mubr.bf16.gmra.mrb[0].mxu0 %v116
    %v258 = vpop.f32.mrb[0].mxu0
    %v259 = vadd.f32 0.0, %v258
    %v260 = vpop.f32.mrb[0].mxu0
    %v261 = vpop.f32.mrb[0].mxu0
    %v262 = vadd.f32 0.0, %v261
    %v263 = vpop.f32.mrb[0].mxu0
    %264 = vmatprep.mubr.bf16.mxu0 %v119
    %265 = vmatmul.mubr.bf16.gmra.mrb[0].mxu0 %v118
    %v266 = vpop.f32.mrb[0].mxu0
    %v267 = vadd.f32 0.0, %v266
    %v268 = vpop.f32.mrb[0].mxu0
    %v269 = vpop.f32.mrb[0].mxu0
    %v270 = vadd.f32 0.0, %v269
    %v271 = vpop.f32.mrb[0].mxu0
    %272 = vmatprep.mubr.bf16.mxu0 %v121
    %273 = vmatmul.mubr.bf16.gmra.mrb[0].mxu0 %v120
    %v274 = vpop.f32.mrb[0].mxu0
    %v275 = vadd.f32 0.0, %v274
    %v276 = vpop.f32.mrb[0].mxu0
    %v277 = vpop.f32.mrb[0].mxu0
    %v278 = vadd.f32 0.0, %v277
    %v279 = vpop.f32.mrb[0].mxu0
    %280 = vdwg.mxu0
    %v281 = vadd.f32 %v54, %v259
    %v282 = vadd.f32 %v55, %v262
    %v283 = vadd.f32 %v56, %v267
    %v284 = vadd.f32 %v57, %v270
    %v285 = vadd.f32 %v58, %v275
    %v286 = vadd.f32 %v59, %v278
    %287 = vst [vmem:[#allocation2] sm:$0xff] %v281
    %288 = vst [vmem:[#allocation2 + $0x8] sm:$0xff] %v282
    %289 = vst [vmem:[#allocation2 + $0x10] sm:$0xff] %v283
    %290 = vst [vmem:[#allocation2 + $0x18] sm:$0xff] %v284
    %291 = vst [vmem:[#allocation2 + $0x20] sm:$0xff] %v285
    %292 = vst [vmem:[#allocation2 + $0x28] sm:$0xff] %v286
    // Predicated region
    $region22: #{tpu_custom_call.1} parent=1 // pred_check
      %p293 = pneg %p44
    $region23: #{tpu_custom_call.1} parent=1 // pred_check_branch
      %295 = sbr.rel (%p293) target = $region25
    $region24: #{tpu_custom_call.1} parent=1 // pred_region
      %v296 = vld [vmem:[#allocation2] sm:$0xff]
      %v297 = vld [vmem:[#allocation2 + $0x8] sm:$0xff]
      %v298 = vld [vmem:[#allocation2 + $0x10] sm:$0xff]
      %v299 = vld [vmem:[#allocation2 + $0x18] sm:$0xff]
      %v300 = vld [vmem:[#allocation2 + $0x20] sm:$0xff]
      %v301 = vld [vmem:[#allocation2 + $0x28] sm:$0xff]
      %v302 = vpack.c.bf16 %v297, %v296
      %v303 = vpack.c.bf16 %v299, %v298
      %v304 = vpack.c.bf16 %v301, %v300
      %v308 = vunpack.c.l.b16 %v302
      %v309 = vunpack.c.h.b16 %v302
      %v310 = vunpack.c.l.b16 %v303
      %v311 = vunpack.c.h.b16 %v303
      %v312 = vunpack.c.l.b16 %v304
      %v313 = vunpack.c.h.b16 %v304
      %v314 = vpack.c.b16 %v308, %v308
      %v315 = vpack.c.b16 %v309, %v309
      %v316 = vpack.c.b16 %v310, %v310
      %v317 = vpack.c.b16 %v311, %v311
      %v318 = vpack.c.b16 %v312, %v312
      %v319 = vpack.c.b16 %v313, %v313
      %326 = vst [vmem:[#allocation8] sm:$0xf] %v314
      %327 = vst [vmem:[#allocation8 + $0x4] sm:$0xf] %v315
      %328 = vst [vmem:[#allocation8 + $0x8] sm:$0xf] %v316
      %329 = vst [vmem:[#allocation8 + $0xc] sm:$0xf] %v317
      %330 = vst [vmem:[#allocation8 + $0x10] sm:$0xf] %v318
      %331 = vst [vmem:[#allocation8 + $0x14] sm:$0xf] %v319
      %332 = vst [vmem:[#allocation9] sm:$0xff] 0.0
      %v333 = vadd.f32 %v296, %v297
      %v334 = vadd.f32 %v333, %v298
      %v335 = vadd.f32 %v334, %v299
      %v336 = vadd.f32 %v335, %v300
      %v337 = vadd.f32 %v336, %v301
      %v338 = vrot.slane %v337, 4
      %v339 = vadd.f32 %v337, %v338
      %v340 = vrot.slane %v339, 2
      %v341 = vadd.f32 %v339, %v340
      %v342 = vrot.slane %v341, 1
      %v343 = vadd.f32 %v341, %v342
      %344 = vst [vmem:[#allocation9] sm:$0x1] %v343
      %v345 = vmul.f32 %v296, %v296
      %v346 = vmul.f32 %v297, %v297
      %v347 = vmul.f32 %v298, %v298
      %v348 = vmul.f32 %v299, %v299
      %v349 = vmul.f32 %v300, %v300
      %v350 = vmul.f32 %v301, %v301
      %v351 = vadd.f32 %v345, %v346
      %v352 = vadd.f32 %v351, %v347
      %v353 = vadd.f32 %v352, %v348
      %v354 = vadd.f32 %v353, %v349
      %v355 = vadd.f32 %v354, %v350
      %v356 = vrot.slane %v355, 4
      %v357 = vadd.f32 %v355, %v356
      %v358 = vrot.slane %v357, 2
      %v359 = vadd.f32 %v357, %v358
      %v360 = vrot.slane %v359, 1
      %v361 = vadd.f32 %v359, %v360
      %362 = vst [vmem:[#allocation9 + $0x1] sm:$0x1] %v361
    $region25: #{tpu_custom_call.1} parent=1 // pred_fallthru
      _
    // Predicated region
    $region26: #{tpu_custom_call.1} parent=1 // pred_check
      _
    $region27: #{tpu_custom_call.1} parent=1 // pred_check_branch
      %364 = sbr.rel (0) target = $region29
    $region28: #{tpu_custom_call.1} parent=1 // pred_region
      %s366 = ssub.s32 384, 384
      %367 = vsyncadd [#allocation5], %s366
      %s368 = sshll.u32 [#allocation8], 4
      %s369 = int_to_ptr.vmem [resolvable:$true] %s368
      %374 = dma.vmem_to_hbm [thread:$0]  %s369, 384, %s2, [#allocation5], 64, 64, 4
    $region29: #{tpu_custom_call.1} parent=1 // pred_fallthru
      _
    // Predicated region
    $region30: #{tpu_custom_call.1} parent=1 // pred_check
      _
    $region31: #{tpu_custom_call.1} parent=1 // pred_check_branch
      %376 = sbr.rel (0) target = $region33
    $region32: #{tpu_custom_call.1} parent=1 // pred_region
      %s378 = ssub.s32 128, 128
      %379 = vsyncadd [#allocation10], %s378
      %s381 = sshll.u32 [#allocation9], 4
      %s382 = int_to_ptr.vmem [resolvable:$true] %s381
      %384 = dma.vmem_to_hbm [thread:$0]  %s382, 128, %s3, [#allocation10]
    $region33: #{tpu_custom_call.1} parent=1 // pred_fallthru
      _
    // Predicated region
    $region34: #{tpu_custom_call.1} parent=1 // pred_check
      _
    $region35: #{tpu_custom_call.1} parent=1 // pred_check_branch
      %386 = sbr.rel (0) target = $region37
    $region36: #{tpu_custom_call.1} parent=1 // pred_region
      %387 = dma.done [#allocation5], 384
    $region37: #{tpu_custom_call.1} parent=1 // pred_fallthru
      _
    // Predicated region
    $region38: #{tpu_custom_call.1} parent=1 // pred_check
      _
    $region39: #{tpu_custom_call.1} parent=1 // pred_check_branch
      %389 = sbr.rel (0) target = $region41
    $region40: #{tpu_custom_call.1} parent=1 // pred_region
      %390 = dma.done [#allocation10], 128
    $region41: #{tpu_custom_call.1} parent=1 // pred_fallthru
      _
    %391 = vsyncpa [#allocation4], 1
    %392 = vsyncpa [#allocation7], 1
    %393 = vsyncpa [#allocation5], 1
    %394 = vsyncpa [#allocation10], 1

</llo_original>
